<compile_context>
chip_gen: v7x
topology: tpu7x:2x2x1
jax: 0.10.0
libtpu: 0.0.40
codegen_flags: <defaults>
</compile_context>

<pallas_src>
import functools
import math

import jax
import jax.numpy as jnp
from jax.experimental import pallas as pl
from jax.experimental.pallas import tpu as pltpu


def _round_up(x, m):
    return (x + m - 1) // m * m


# ----------------------------------------------------------------------------
# Primary path: VMEM-resident table, in-kernel row gather, fused scale + pos.
# ----------------------------------------------------------------------------
def _embed_pe_vmem_kernel(tok_sref, pos_ref, emb_ref, out_ref, gbuf, *,
                          rows, vocab, scale):
    """One grid step over a flattened (rows, E) slab.

    tok_sref : (N_pad,) int32 in SMEM (scalar-prefetched token ids)
    pos_ref  : (rows, E) f32 block of the per-row positional table
    emb_ref  : (V, E) embedding table, VMEM-resident across the whole grid
    out_ref  : (rows, E) output block
    gbuf     : (rows, E) VMEM gather scratch (table dtype)
    """
    i = pl.program_id(0)
    base = i * rows

    # In-VMEM row gather: one dynamic-row load + store per token, no HBM DMA
    # descriptors and no semaphore waits.
    @pl.loop(0, rows)
    def _gather(r):
        # PyTorch nn.Embedding raises on out-of-range ids; clamp defensively so
        # a bad id can never become an out-of-bounds VMEM access.
        tok = jnp.clip(tok_sref[base + r], 0, vocab - 1)
        gbuf[pl.ds(r, 1), :] = emb_ref[pl.ds(tok, 1), :]

    # Dense, lane-aligned epilogue: scale + positional add + single big store.
    out_ref[...] = (gbuf[...].astype(jnp.float32) * scale
                    + pos_ref[...]).astype(out_ref.dtype)


def _embed_vmem_gather(tokens, emb_table, pos_table, *, scale, out_dtype,
                       rows_per_block):
    S, B = tokens.shape
    V, E = emb_table.shape
    N = S * B
    itemsize = jnp.dtype(emb_table.dtype).itemsize
    table_bytes = V * E * itemsize

    # Cap the per-step working set: 2x table (double-buffer worst case) +
    # 2x pos block + 2x out block + gather scratch must fit v7x's 64 MiB VMEM.
    budget = 40 * 2**20
    block_budget = max(budget - 2 * table_bytes, 5 * 8 * E * 4)
    tr_cap = max(8, (block_budget // (5 * E * 4)) // 8 * 8)
    tr = min(max(8, rows_per_block // 8 * 8), tr_cap, _round_up(N, 8))
    n_pad = pl.cdiv(N, tr) * tr

    # Flatten (seq, batch) -> rows; row r = s*B + b.  Pad with id 0 (discarded).
    tok_flat = tokens.astype(jnp.int32).reshape(N)
    if n_pad > N:
        tok_flat = jnp.pad(tok_flat, (0, n_pad - N))

    # Pre-repeat the positional rows over batch so the kernel block is a dense
    # (rows, E) slab with no broadcast over a padded (B, E) tile.
    pos_rows = jnp.repeat(pos_table[:S].astype(jnp.float32), B, axis=0)
    if n_pad > N:
        pos_rows = jnp.pad(pos_rows, ((0, n_pad - N), (0, 0)))

    kernel = functools.partial(_embed_pe_vmem_kernel, rows=tr, vocab=V,
                               scale=scale)

    out = pl.pallas_call(
        kernel,
        out_shape=jax.ShapeDtypeStruct((n_pad, E), out_dtype),
        grid_spec=pltpu.PrefetchScalarGridSpec(
            num_scalar_prefetch=1,                        # token ids -> SMEM
            grid=(n_pad // tr,),
            in_specs=[
                pl.BlockSpec((tr, E), lambda i, tok: (i, 0)),   # pos rows
                pl.BlockSpec((V, E), lambda i, tok: (0, 0)),    # table, resident
            ],
            out_specs=pl.BlockSpec((tr, E), lambda i, tok: (i, 0)),
            scratch_shapes=[pltpu.VMEM((tr, E), emb_table.dtype)],
        ),
        compiler_params=pltpu.CompilerParams(
            dimension_semantics=("parallel",),
            vmem_limit_bytes=48 * 2**20),
        cost_estimate=pl.CostEstimate(
            flops=2 * n_pad * E,
            transcendentals=0,
            bytes_accessed=(V * E * itemsize                   # table (once)
                            + n_pad * E * 4                    # pos rows
                            + n_pad * E * jnp.dtype(out_dtype).itemsize
                            + n_pad * 4)),                     # token ids
    )(tok_flat, pos_rows, emb_table)

    return out[:N].reshape(S, B, E)


# ----------------------------------------------------------------------------
# Fallback path: table stays in HBM, per-row async-copy gather (large vocabs).
# ----------------------------------------------------------------------------
def _embed_pe_hbm_kernel(tok_sref, pos_ref, emb_hbm, out_ref, gbuf, sem, *,
                         ts, batch, vocab, scale):
    i = pl.program_id(0)
    base = i * ts * batch

    # Issue every row gather before waiting on any of them so the small DMAs
    # overlap each other (and the previous step's output writeback).
    @pl.loop(0, ts)
    def _issue(s):
        for b in range(batch):                       # static unroll over batch
            tok = jnp.clip(tok_sref[base + s * batch + b], 0, vocab - 1)
            pltpu.make_async_copy(emb_hbm.at[tok], gbuf.at[s, b],
                                  sem.at[0]).start()

    # Waits use a same-shaped dummy descriptor (all copies are identical size).
    @pl.loop(0, ts)
    def _wait(s):
        for b in range(batch):
            pltpu.make_async_copy(emb_hbm.at[0], gbuf.at[s, b],
                                  sem.at[0]).wait()

    pos = pos_ref[...]                               # (ts, E)
    out_ref[...] = (gbuf[...].astype(jnp.float32) * scale
                    + pos[:, None, :]).astype(out_ref.dtype)


def _embed_hbm_gather(tokens, emb_table, pos_table, *, scale, out_dtype,
                      target_rows=256):
    S, B = tokens.shape
    V, E = emb_table.shape

    # ts is always a multiple of 8 so the (ts, E) pos block obeys the (8,128)
    # divisibility rule even when the grid has more than one step.
    ts = max(8, min(_round_up(S, 8), max(target_rows // max(B, 1), 8) // 8 * 8))
    s_pad = pl.cdiv(S, ts) * ts

    tokens = tokens.astype(jnp.int32)
    if s_pad > S:
        tokens = jnp.pad(tokens, ((0, s_pad - S), (0, 0)))   # pad with id 0

    pos_use = pos_table.astype(jnp.float32)
    if pos_use.shape[0] < s_pad:
        pos_use = jnp.pad(pos_use, ((0, s_pad - pos_use.shape[0]), (0, 0)))
    pos_use = pos_use[:s_pad]

    tok_flat = tokens.reshape(s_pad * B)

    kernel = functools.partial(_embed_pe_hbm_kernel, ts=ts, batch=B, vocab=V,
                               scale=scale)

    out = pl.pallas_call(
        kernel,
        out_shape=jax.ShapeDtypeStruct((s_pad, B, E), out_dtype),
        grid_spec=pltpu.PrefetchScalarGridSpec(
            num_scalar_prefetch=1,                    # token ids -> SMEM
            grid=(s_pad // ts,),
            in_specs=[
                pl.BlockSpec((ts, E), lambda i, tok: (i, 0)),   # pos rows
                pl.BlockSpec(memory_space=pl.ANY),              # table in HBM
            ],
            out_specs=pl.BlockSpec((ts, B, E), lambda i, tok: (i, 0, 0)),
            scratch_shapes=[
                pltpu.VMEM((ts, B, E), emb_table.dtype),
                pltpu.SemaphoreType.DMA((1,)),
            ]),
        compiler_params=pltpu.CompilerParams(
            dimension_semantics=("parallel",)),
    )(tok_flat, pos_use, emb_table)

    return out[:S]


# ----------------------------------------------------------------------------
# Public wrapper
# ----------------------------------------------------------------------------
def token_embedding_with_pos(tokens, emb_table, pos_table, *,
                             rows_per_block=2048,
                             vmem_table_limit_bytes=16 * 2**20,
                             out_dtype=None,
                             force_hbm_gather=False):
    """tokens: int (S, B); emb_table: (V, E); pos_table: (maxlen, E) f32.

    Returns (S, B, E) = emb_table[tokens] * sqrt(E) + pos_table[:S, None, :].
    """
    V, E = emb_table.shape
    scale = float(math.sqrt(E))
    out_dtype = emb_table.dtype if out_dtype is None else out_dtype
    table_bytes = V * E * jnp.dtype(emb_table.dtype).itemsize

    if not force_hbm_gather and table_bytes <= vmem_table_limit_bytes:
        try:
            out = _embed_vmem_gather(tokens, emb_table, pos_table, scale=scale,
                                     out_dtype=out_dtype,
                                     rows_per_block=rows_per_block)
            return jax.block_until_ready(out)
        except Exception:
            # Compatibility guard: if this Mosaic build rejects the dynamic-row
            # VMEM gather form, fall back to the HBM DMA-gather path below.
            pass
    return _embed_hbm_gather(tokens, emb_table, pos_table, scale=scale,
                             out_dtype=out_dtype)


def make_positional_encoding(emb_size, maxlen):
    """Matches the PyTorch PositionalEncoding buffer, shape (maxlen, emb_size)."""
    den = jnp.exp(-jnp.arange(0, emb_size, 2, dtype=jnp.float32)
                  * (math.log(10000.0) / emb_size))
    pos = jnp.arange(maxlen, dtype=jnp.float32)[:, None]
    ang = pos * den[None, :]
    # interleave: even cols = sin, odd cols = cos
    return jnp.stack([jnp.sin(ang), jnp.cos(ang)], axis=-1).reshape(maxlen,
                                                                    emb_size)


if __name__ == "__main__":
    vocab_size = 64
    d_model = 128          # lane-aligned (multiple of 128)
    S, B = 8, 2            # (seq, batch), seq-first as in batch_first=False
    maxlen = 32

    key = jax.random.PRNGKey(0)
    k_emb, k_tok = jax.random.split(key)

    emb_table = jax.random.normal(k_emb, (vocab_size, d_model),
                                  dtype=jnp.float32)
    tokens = jax.random.randint(k_tok, (S, B), 0, vocab_size, dtype=jnp.int32)
    pos_table = make_positional_encoding(d_model, maxlen)

    # Reference: gather * sqrt(d_model) + positional encoding (eval-mode dropout).
    ref = emb_table[tokens] * math.sqrt(d_model) + pos_table[:S][:, None, :]

    # Primary (VMEM-resident table) path.
    out = token_embedding_with_pos(tokens, emb_table, pos_table)
    out = jax.block_until_ready(out)
    assert out.shape == (S, B, d_model)
    assert jnp.allclose(out, ref, atol=1e-5, rtol=1e-5)

    # Also exercise the large-vocab HBM DMA-gather fallback on the same inputs.
    out_hbm = token_embedding_with_pos(tokens, emb_table, pos_table,
                                       force_hbm_gather=True)
    out_hbm = jax.block_until_ready(out_hbm)
    assert out_hbm.shape == (S, B, d_model)
    assert jnp.allclose(out_hbm, ref, atol=1e-5, rtol=1e-5)

    print("KERNEL_OK")
</pallas_src>

<mosaic_0001>
module attributes {stable_mosaic.version = 11 : i64} {
  func.func @_embed_pe_vmem_kernel(%arg0: i32, %arg1: memref<16xi32, #tpu.memory_space<smem>>, %arg2: memref<16x128xf32, #tpu.memory_space<vmem>>, %arg3: memref<64x128xf32, #tpu.memory_space<vmem>>, %arg4: memref<16x128xf32, #tpu.memory_space<vmem>>, %arg5: memref<16x128xf32, #tpu.memory_space<vmem>>) attributes {dimension_semantics = [#tpu.dimension_semantics<parallel>], iteration_bounds = array<i64: 1>, scalar_prefetch = 1 : i64, scratch_operands = 1 : i64, tpu.core_type = #tpu.core_type<tc>, window_params = [{transform_indices = @transform_0, window_bounds = array<i64: 16, 128>}, {pipeline_mode = #tpu.pipeline_mode<synchronous>, transform_indices = @transform_1, window_bounds = array<i64: 64, 128>}, {transform_indices = @transform_2, window_bounds = array<i64: 16, 128>}]} {
    %c16_i32 = arith.constant 16 : i32
    %0 = arith.muli %arg0, %c16_i32 : i32
    %c0_i32 = arith.constant 0 : i32
    %c16_i32_0 = arith.constant 16 : i32
    %1 = arith.addi %c0_i32, %c16_i32_0 : i32
    %c1_i32 = arith.constant 1 : i32
    scf.for %arg6 = %c0_i32 to %1 step %c1_i32  : i32 {
      %c1_i32_7 = arith.constant 1 : i32
      %8 = arith.muli %arg6, %c1_i32_7 : i32
      %c0_i32_8 = arith.constant 0 : i32
      %9 = arith.addi %c0_i32_8, %8 : i32
      %10 = arith.addi %0, %9 : i32
      %11 = arith.index_cast %10 : i32 to index
      %12 = memref.load %arg1[%11] : memref<16xi32, #tpu.memory_space<smem>>
      %c0_i32_9 = arith.constant 0 : i32
      %c63_i32 = arith.constant 63 : i32
      %13 = arith.maxsi %c0_i32_9, %12 : i32
      %14 = arith.minsi %c63_i32, %13 : i32
      %15 = arith.index_cast %14 : i32 to index
      %c0_10 = arith.constant 0 : index
      %16 = vector.load %arg3[%15, %c0_10] : memref<64x128xf32, #tpu.memory_space<vmem>>, vector<1x128xf32>
      %17 = arith.index_cast %9 : i32 to index
      %c0_11 = arith.constant 0 : index
      %18 = vector.load %arg5[%17, %c0_11] : memref<16x128xf32, #tpu.memory_space<vmem>>, vector<1x128xf32>
      tpu.vector_store %arg5[%17, %c0_11], %16 {strides = array<i32>} : memref<16x128xf32, #tpu.memory_space<vmem>>, vector<1x128xf32>,
    }
    %c16_i32_1 = arith.constant 16 : i32
    %c0 = arith.constant 0 : index
    %c0_2 = arith.constant 0 : index
    %2 = vector.load %arg5[%c0, %c0_2] : memref<16x128xf32, #tpu.memory_space<vmem>>, vector<16x128xf32>
    %cst = arith.constant 11.3137083 : f32
    %3 = vector.broadcast %cst : f32 to vector<16x128xf32>
    %4 = arith.mulf %2, %3 : vector<16x128xf32>
    %c0_3 = arith.constant 0 : index
    %c0_4 = arith.constant 0 : index
    %5 = vector.load %arg2[%c0_3, %c0_4] : memref<16x128xf32, #tpu.memory_space<vmem>>, vector<16x128xf32>
    %6 = arith.addf %4, %5 : vector<16x128xf32>
    %c0_5 = arith.constant 0 : index
    %c0_6 = arith.constant 0 : index
    %7 = vector.load %arg4[%c0_5, %c0_6] : memref<16x128xf32, #tpu.memory_space<vmem>>, vector<16x128xf32>
    tpu.vector_store %arg4[%c0_5, %c0_6], %6 {strides = array<i32>} : memref<16x128xf32, #tpu.memory_space<vmem>>, vector<16x128xf32>,
    return
  }
  func.func @transform_0(%arg0: i32, %arg1: memref<16xi32, #tpu.memory_space<smem>>) -> (i32, i32) {
    %c0_i32 = arith.constant 0 : i32
    %c0_i32_0 = arith.constant 0 : i32
    return %arg0, %c0_i32 : i32, i32
  }
  func.func @transform_1(%arg0: i32, %arg1: memref<16xi32, #tpu.memory_space<smem>>) -> (i32, i32) {
    %c0_i32 = arith.constant 0 : i32
    %c0_i32_0 = arith.constant 0 : i32
    %c0_i32_1 = arith.constant 0 : i32
    return %c0_i32, %c0_i32_0 : i32, i32
  }
  func.func @transform_2(%arg0: i32, %arg1: memref<16xi32, #tpu.memory_space<smem>>) -> (i32, i32) {
    %c0_i32 = arith.constant 0 : i32
    %c0_i32_0 = arith.constant 0 : i32
    return %arg0, %c0_i32 : i32, i32
  }
}

module attributes {stable_mosaic.version = 11 : i64} {
  func.func @_embed_pe_hbm_kernel(%arg0: i32, %arg1: memref<16xi32, #tpu.memory_space<smem>>, %arg2: memref<8x128xf32, #tpu.memory_space<vmem>>, %arg3: memref<64x128xf32, #tpu.memory_space<any>>, %arg4: memref<8x2x128xf32, #tpu.memory_space<vmem>>, %arg5: memref<8x2x128xf32, #tpu.memory_space<vmem>>, %arg6: memref<1x!tpu.dma_semaphore, #tpu.memory_space<semaphore_mem>>) attributes {dimension_semantics = [#tpu.dimension_semantics<parallel>], iteration_bounds = array<i64: 1>, scalar_prefetch = 1 : i64, scratch_operands = 2 : i64, tpu.core_type = #tpu.core_type<tc>, window_params = [{transform_indices = @transform_0, window_bounds = array<i64: 8, 128>}, {}, {transform_indices = @transform_2, window_bounds = array<i64: 8, 2, 128>}]} {
    %c8_i32 = arith.constant 8 : i32
    %0 = arith.muli %arg0, %c8_i32 : i32
    %c2_i32 = arith.constant 2 : i32
    %1 = arith.muli %0, %c2_i32 : i32
    %c0_i32 = arith.constant 0 : i32
    %c8_i32_0 = arith.constant 8 : i32
    %2 = arith.addi %c0_i32, %c8_i32_0 : i32
    %c1_i32 = arith.constant 1 : i32
    scf.for %arg7 = %c0_i32 to %2 step %c1_i32  : i32 {
      %c1_i32_13 = arith.constant 1 : i32
      %12 = arith.muli %arg7, %c1_i32_13 : i32
      %c0_i32_14 = arith.constant 0 : i32
      %13 = arith.addi %c0_i32_14, %12 : i32
      %c2_i32_15 = arith.constant 2 : i32
      %14 = arith.muli %13, %c2_i32_15 : i32
      %15 = arith.addi %1, %14 : i32
      %c0_i32_16 = arith.constant 0 : i32
      %16 = arith.addi %15, %c0_i32_16 : i32
      %17 = arith.index_cast %16 : i32 to index
      %18 = memref.load %arg1[%17] : memref<16xi32, #tpu.memory_space<smem>>
      %c0_i32_17 = arith.constant 0 : i32
      %c63_i32 = arith.constant 63 : i32
      %19 = arith.maxsi %c0_i32_17, %18 : i32
      %20 = arith.minsi %c63_i32, %19 : i32
      %c0_i32_18 = arith.constant 0 : i32
      %c0_i32_19 = arith.constant 0 : i32
      %c0_i32_20 = arith.constant 0 : i32
      %21 = tpu.memref_slice %arg3[%20, %c0_i32_20] : memref<64x128xf32, #tpu.memory_space<any>> -> memref<1x128xf32, #tpu.memory_space<any>>
      %22 = tpu.memref_squeeze %21 : memref<1x128xf32, #tpu.memory_space<any>> -> memref<128xf32, #tpu.memory_space<any>>
      %c0_i32_21 = arith.constant 0 : i32
      %23 = tpu.memref_slice %arg5[%13, %c0_i32_18, %c0_i32_21] : memref<8x2x128xf32, #tpu.memory_space<vmem>> -> memref<1x1x128xf32, #tpu.memory_space<vmem>>
      %24 = tpu.memref_squeeze %23 : memref<1x1x128xf32, #tpu.memory_space<vmem>> -> memref<128xf32, #tpu.memory_space<vmem>>
      %25 = tpu.memref_slice %arg6[%c0_i32_19] : memref<1x!tpu.dma_semaphore, #tpu.memory_space<semaphore_mem>> -> memref<1x!tpu.dma_semaphore, #tpu.memory_space<semaphore_mem>>
      %26 = tpu.memref_squeeze %25 : memref<1x!tpu.dma_semaphore, #tpu.memory_space<semaphore_mem>> -> memref<!tpu.dma_semaphore, #tpu.memory_space<semaphore_mem>>
      tpu.enqueue_dma source(%22 : memref<128xf32, #tpu.memory_space<any>>) target(%24 : memref<128xf32, #tpu.memory_space<vmem>>) target_semaphore(%26 : memref<!tpu.dma_semaphore, #tpu.memory_space<semaphore_mem>>)
      %c2_i32_22 = arith.constant 2 : i32
      %27 = arith.muli %13, %c2_i32_22 : i32
      %28 = arith.addi %1, %27 : i32
      %c1_i32_23 = arith.constant 1 : i32
      %29 = arith.addi %28, %c1_i32_23 : i32
      %30 = arith.index_cast %29 : i32 to index
      %31 = memref.load %arg1[%30] : memref<16xi32, #tpu.memory_space<smem>>
      %c0_i32_24 = arith.constant 0 : i32
      %c63_i32_25 = arith.constant 63 : i32
      %32 = arith.maxsi %c0_i32_24, %31 : i32
      %33 = arith.minsi %c63_i32_25, %32 : i32
      %c1_i32_26 = arith.constant 1 : i32
      %c0_i32_27 = arith.constant 0 : i32
      %c0_i32_28 = arith.constant 0 : i32
      %34 = tpu.memref_slice %arg3[%33, %c0_i32_28] : memref<64x128xf32, #tpu.memory_space<any>> -> memref<1x128xf32, #tpu.memory_space<any>>
      %35 = tpu.memref_squeeze %34 : memref<1x128xf32, #tpu.memory_space<any>> -> memref<128xf32, #tpu.memory_space<any>>
      %c0_i32_29 = arith.constant 0 : i32
      %36 = tpu.memref_slice %arg5[%13, %c1_i32_26, %c0_i32_29] : memref<8x2x128xf32, #tpu.memory_space<vmem>> -> memref<1x1x128xf32, #tpu.memory_space<vmem>>
      %37 = tpu.memref_squeeze %36 : memref<1x1x128xf32, #tpu.memory_space<vmem>> -> memref<128xf32, #tpu.memory_space<vmem>>
      %38 = tpu.memref_slice %arg6[%c0_i32_27] : memref<1x!tpu.dma_semaphore, #tpu.memory_space<semaphore_mem>> -> memref<1x!tpu.dma_semaphore, #tpu.memory_space<semaphore_mem>>
      %39 = tpu.memref_squeeze %38 : memref<1x!tpu.dma_semaphore, #tpu.memory_space<semaphore_mem>> -> memref<!tpu.dma_semaphore, #tpu.memory_space<semaphore_mem>>
      tpu.enqueue_dma source(%35 : memref<128xf32, #tpu.memory_space<any>>) target(%37 : memref<128xf32, #tpu.memory_space<vmem>>) target_semaphore(%39 : memref<!tpu.dma_semaphore, #tpu.memory_space<semaphore_mem>>)
    }
    %c8_i32_1 = arith.constant 8 : i32
    %c0_i32_2 = arith.constant 0 : i32
    %c8_i32_3 = arith.constant 8 : i32
    %3 = arith.addi %c0_i32_2, %c8_i32_3 : i32
    %c1_i32_4 = arith.constant 1 : i32
    scf.for %arg7 = %c0_i32_2 to %3 step %c1_i32_4  : i32 {
      %c1_i32_13 = arith.constant 1 : i32
      %12 = arith.muli %arg7, %c1_i32_13 : i32
      %c0_i32_14 = arith.constant 0 : i32
      %13 = arith.addi %c0_i32_14, %12 : i32
      %c0_i32_15 = arith.constant 0 : i32
      %c0_i32_16 = arith.constant 0 : i32
      %c0_i32_17 = arith.constant 0 : i32
      %c0_i32_18 = arith.constant 0 : i32
      %14 = tpu.memref_slice %arg3[%c0_i32_15, %c0_i32_18] : memref<64x128xf32, #tpu.memory_space<any>> -> memref<1x128xf32, #tpu.memory_space<any>>
      %15 = tpu.memref_squeeze %14 : memref<1x128xf32, #tpu.memory_space<any>> -> memref<128xf32, #tpu.memory_space<any>>
      %c0_i32_19 = arith.constant 0 : i32
      %16 = tpu.memref_slice %arg5[%13, %c0_i32_16, %c0_i32_19] : memref<8x2x128xf32, #tpu.memory_space<vmem>> -> memref<1x1x128xf32, #tpu.memory_space<vmem>>
      %17 = tpu.memref_squeeze %16 : memref<1x1x128xf32, #tpu.memory_space<vmem>> -> memref<128xf32, #tpu.memory_space<vmem>>
      %18 = tpu.memref_slice %arg6[%c0_i32_17] : memref<1x!tpu.dma_semaphore, #tpu.memory_space<semaphore_mem>> -> memref<1x!tpu.dma_semaphore, #tpu.memory_space<semaphore_mem>>
      %19 = tpu.memref_squeeze %18 : memref<1x!tpu.dma_semaphore, #tpu.memory_space<semaphore_mem>> -> memref<!tpu.dma_semaphore, #tpu.memory_space<semaphore_mem>>
      tpu.wait_dma2 semaphore(%19 : memref<!tpu.dma_semaphore, #tpu.memory_space<semaphore_mem>>) src(%15 : memref<128xf32, #tpu.memory_space<any>>) dst(%17 : memref<128xf32, #tpu.memory_space<vmem>>)
      %c0_i32_20 = arith.constant 0 : i32
      %c1_i32_21 = arith.constant 1 : i32
      %c0_i32_22 = arith.constant 0 : i32
      %c0_i32_23 = arith.constant 0 : i32
      %20 = tpu.memref_slice %arg3[%c0_i32_20, %c0_i32_23] : memref<64x128xf32, #tpu.memory_space<any>> -> memref<1x128xf32, #tpu.memory_space<any>>
      %21 = tpu.memref_squeeze %20 : memref<1x128xf32, #tpu.memory_space<any>> -> memref<128xf32, #tpu.memory_space<any>>
      %c0_i32_24 = arith.constant 0 : i32
      %22 = tpu.memref_slice %arg5[%13, %c1_i32_21, %c0_i32_24] : memref<8x2x128xf32, #tpu.memory_space<vmem>> -> memref<1x1x128xf32, #tpu.memory_space<vmem>>
      %23 = tpu.memref_squeeze %22 : memref<1x1x128xf32, #tpu.memory_space<vmem>> -> memref<128xf32, #tpu.memory_space<vmem>>
      %24 = tpu.memref_slice %arg6[%c0_i32_22] : memref<1x!tpu.dma_semaphore, #tpu.memory_space<semaphore_mem>> -> memref<1x!tpu.dma_semaphore, #tpu.memory_space<semaphore_mem>>
      %25 = tpu.memref_squeeze %24 : memref<1x!tpu.dma_semaphore, #tpu.memory_space<semaphore_mem>> -> memref<!tpu.dma_semaphore, #tpu.memory_space<semaphore_mem>>
      tpu.wait_dma2 semaphore(%25 : memref<!tpu.dma_semaphore, #tpu.memory_space<semaphore_mem>>) src(%21 : memref<128xf32, #tpu.memory_space<any>>) dst(%23 : memref<128xf32, #tpu.memory_space<vmem>>)
    }
    %c8_i32_5 = arith.constant 8 : i32
    %c0 = arith.constant 0 : index
    %c0_6 = arith.constant 0 : index
    %4 = vector.load %arg2[%c0, %c0_6] : memref<8x128xf32, #tpu.memory_space<vmem>>, vector<8x128xf32>
    %c0_7 = arith.constant 0 : index
    %c0_8 = arith.constant 0 : index
    %c0_9 = arith.constant 0 : index
    %5 = vector.load %arg5[%c0_7, %c0_8, %c0_9] : memref<8x2x128xf32, #tpu.memory_space<vmem>>, vector<8x2x128xf32>
    %cst = arith.constant 11.3137083 : f32
    %6 = vector.broadcast %cst : f32 to vector<8x2x128xf32>
    %7 = arith.mulf %5, %6 : vector<8x2x128xf32>
    %8 = vector.shape_cast %4 : vector<8x128xf32> to vector<8x1x128xf32>
    %9 = vector.broadcast %8 : vector<8x1x128xf32> to vector<8x2x128xf32>
    %10 = arith.addf %7, %9 : vector<8x2x128xf32>
    %c0_10 = arith.constant 0 : index
    %c0_11 = arith.constant 0 : index
    %c0_12 = arith.constant 0 : index
    %11 = vector.load %arg4[%c0_10, %c0_11, %c0_12] : memref<8x2x128xf32, #tpu.memory_space<vmem>>, vector<8x2x128xf32>
    tpu.vector_store %arg4[%c0_10, %c0_11, %c0_12], %10 {strides = array<i32>} : memref<8x2x128xf32, #tpu.memory_space<vmem>>, vector<8x2x128xf32>,
    return
  }
  func.func @transform_0(%arg0: i32, %arg1: memref<16xi32, #tpu.memory_space<smem>>) -> (i32, i32) {
    %c0_i32 = arith.constant 0 : i32
    %c0_i32_0 = arith.constant 0 : i32
    return %arg0, %c0_i32 : i32, i32
  }
  func.func @transform_2(%arg0: i32, %arg1: memref<16xi32, #tpu.memory_space<smem>>) -> (i32, i32, i32) {
    %c0_i32 = arith.constant 0 : i32
    %c0_i32_0 = arith.constant 0 : i32
    %c0_i32_1 = arith.constant 0 : i32
    return %arg0, %c0_i32, %c0_i32_0 : i32, i32, i32
  }
}

</mosaic_0001>

<llo_original>
// kernel: tpu_custom_call.1
$region0: #{tpu_custom_call.1}
  #allocation0 [shape = 'u32[]', space=smem, size = 0x4, offset = 0x4, fixed_abs, tag = 'smem constant byte address 0x4 - core index']
  #allocation1 [shape = 'u32[144,128]{1,0:T(1,128)}', space=vmem, size = 0x12000, scoped, tag = 'internal scratch']
  #allocation2 [shape = 'f32[16,128]{1,0:T(8,128)}', space=vmem, size = 0x2000, scoped, tag = 'scratch operand']
  #allocation3 [shape = 's32[1]{0}', space=sflag, size = 0x4, scoped, tag = 'scoped memory for tpu_custom_call.1']
  #allocation4 [shape = 'u8[512]{0}', space=smem, size = 0x200, scoped, tag = 'prefetched SMEM operand 0']
  %s0 = inlined_call_operand.hbm [shape: s32[16], index: 0, kind: input, shape index: {}]
  %s1 = inlined_call_operand.hbm [shape: f32[16,128], index: 1, kind: input, shape index: {}]
  %s2 = inlined_call_operand.hbm [shape: f32[64,128], index: 2, kind: input, shape index: {}]
  %s3 = inlined_call_operand.hbm [shape: f32[16,128], index: 3, kind: output, shape index: {}]
  %s4 = sld [smem:[#allocation0]]
  $region33: #{tpu_custom_call.1} parent=0
    _
  %s6 = ssub.s32 1, %s4
  %s7 = scalar_select 0, %s6, %s4
  %9 = dma.hbm_to_smem %s0, 16, [#allocation4], [#allocation3]
  %10 = dma.done [#allocation3], 16
  %11 = sfence
  $region1: #{tpu_custom_call.1} parent=0
    #allocation5 [shape = 'u8[8192]{0}', space=vmem, size = 0x2000, scoped, tag = 'input window, operand 1, single buffered']
    #allocation6 [shape = 's32[1]{0}', space=sflag, size = 0x4, scoped, tag = 'scoped memory for tpu_custom_call.1']
    #allocation7 [shape = 's32[1]{0}', space=sflag, size = 0x4, scoped, tag = 'scoped memory for tpu_custom_call.1']
    #allocation8 [shape = 'u8[32768]{0}', space=vmem, size = 0x8000, scoped, tag = 'input window, operand 2, single buffered']
    #allocation9 [shape = 's32[1]{0}', space=sflag, size = 0x4, scoped, tag = 'scoped memory for tpu_custom_call.1']
    #allocation10 [shape = 'u8[8192]{0}', space=vmem, size = 0x2000, scoped, tag = 'output window, operand 0, single buffered']
    %12 = vsyncpa [#allocation6], 0
    %13 = vsyncpa [#allocation9], 0
    %14 = vsyncpa [#allocation7], 0
    // Predicated region
    $region2: #{tpu_custom_call.1} parent=1 // pred_check
      _
    $region3: #{tpu_custom_call.1} parent=1 // pred_check_branch
      %16 = sbr.rel (0) target = $region5
    $region4: #{tpu_custom_call.1} parent=1 // pred_region
      %s18 = ssub.s32 256, 256
      %19 = vsyncadd [#allocation6], %s18
      %s20 = sshll.u32 [#allocation5], 4
      %s21 = int_to_ptr.vmem [resolvable:$true] %s20
      %26 = dma.hbm_to_vmem [thread:$0]  %s1, 256, %s21, [#allocation6], 128, 128, 8
    $region5: #{tpu_custom_call.1} parent=1 // pred_fallthru
      _
    // Predicated region
    $region6: #{tpu_custom_call.1} parent=1 // pred_check
      _
    $region7: #{tpu_custom_call.1} parent=1 // pred_check_branch
      %28 = sbr.rel (0) target = $region9
    $region8: #{tpu_custom_call.1} parent=1 // pred_region
      %s30 = ssub.s32 1024, 1024
      %31 = vsyncadd [#allocation9], %s30
      %s32 = sshll.u32 [#allocation8], 4
      %s33 = int_to_ptr.vmem [resolvable:$true] %s32
      %38 = dma.hbm_to_vmem [thread:$0]  %s2, 1024, %s33, [#allocation9], 128, 128, 8
    $region9: #{tpu_custom_call.1} parent=1 // pred_fallthru
      _
    // Predicated region
    $region10: #{tpu_custom_call.1} parent=1 // pred_check
      _
    $region11: #{tpu_custom_call.1} parent=1 // pred_check_branch
      %40 = sbr.rel (0) target = $region13
    $region12: #{tpu_custom_call.1} parent=1 // pred_region
      %41 = dma.done [#allocation6], 256
    $region13: #{tpu_custom_call.1} parent=1 // pred_fallthru
      _
    // Predicated region
    $region14: #{tpu_custom_call.1} parent=1 // pred_check
      _
    $region15: #{tpu_custom_call.1} parent=1 // pred_check_branch
      %43 = sbr.rel (0) target = $region17
    $region16: #{tpu_custom_call.1} parent=1 // pred_region
      %44 = dma.done [#allocation9], 1024
    $region17: #{tpu_custom_call.1} parent=1 // pred_fallthru
      _
    %s45 = smul.u32 0, 16
    loop: start=0, step=1, limit=16
    $region18: #{tpu_custom_call.1} parent=1 // loop_pre_header
      _
    $region19: #{tpu_custom_call.1} parent=1 // loop_header
      %s47 = sphi 0, %s51
      %p48 = scmp.ge.s32.totalorder %s47, 16
    $region20: #{tpu_custom_call.1} parent=1 // loop_header_branch
      %50 = sbr.rel (%p48) target = $region24
    $region21: #{tpu_custom_call.1} parent=1 // loop_body
      %s52 = sadd.s32 %s45, %s47
      %s53 = sld [smem:[#allocation4 + %s52]]
      %p54 = scmp.gt.s32.totalorder %s53, 0
      %s55 = scalar_select %p54, %s53, 0
      %p56 = scmp.lt.s32.totalorder %s55, 63
      %s57 = scalar_select %p56, %s55, 63
      %s58 = scalar_lea.vmem [#allocation8], %s57
      %v59 = vld [vmem:[%s58] sm:$0x1]
      %s60 = scalar_lea.vmem [#allocation2], %s47
      %61 = vst [vmem:[%s60] sm:$0x1] %v59
    $region22: #{tpu_custom_call.1} parent=1 // loop_footer
      %s51 = sadd.s32 1, %s47
    $region23: #{tpu_custom_call.1} parent=1 // loop_footer_branch
      %46 = sbr.rel target = $region19
    $region24: #{tpu_custom_call.1} parent=1 // loop_exit
      _
    %v62 = vld [vmem:[#allocation2] sm:$0xff]
    %v63 = vld [vmem:[#allocation2 + $0x8] sm:$0xff]
    %v64 = vmul.f32 %v62, 11.313708
    %v65 = vmul.f32 %v63, 11.313708
    %v66 = vld [vmem:[#allocation5] sm:$0xff]
    %v67 = vld [vmem:[#allocation5 + $0x8] sm:$0xff]
    %v68 = vadd.f32 %v64, %v66
    %v69 = vadd.f32 %v65, %v67
    %70 = vst [vmem:[#allocation10] sm:$0xff] %v68
    %71 = vst [vmem:[#allocation10 + $0x8] sm:$0xff] %v69
    // Predicated region
    $region25: #{tpu_custom_call.1} parent=1 // pred_check
      _
    $region26: #{tpu_custom_call.1} parent=1 // pred_check_branch
      %73 = sbr.rel (0) target = $region28
    $region27: #{tpu_custom_call.1} parent=1 // pred_region
      %s75 = ssub.s32 256, 256
      %76 = vsyncadd [#allocation7], %s75
      %s77 = sshll.u32 [#allocation10], 4
      %s78 = int_to_ptr.vmem [resolvable:$true] %s77
      %83 = dma.vmem_to_hbm [thread:$0]  %s78, 256, %s3, [#allocation7], 128, 128, 8
    $region28: #{tpu_custom_call.1} parent=1 // pred_fallthru
      _
    // Predicated region
    $region29: #{tpu_custom_call.1} parent=1 // pred_check
      _
    $region30: #{tpu_custom_call.1} parent=1 // pred_check_branch
      %85 = sbr.rel (0) target = $region32
    $region31: #{tpu_custom_call.1} parent=1 // pred_region
      %86 = dma.done [#allocation7], 256
    $region32: #{tpu_custom_call.1} parent=1 // pred_fallthru
      _
    %87 = vsyncpa [#allocation6], 1
    %88 = vsyncpa [#allocation9], 1
    %89 = vsyncpa [#allocation7], 1

// kernel: tpu_custom_call.1
$region0: #{tpu_custom_call.1}
  #allocation0 [shape = 'u32[]', space=smem, size = 0x4, offset = 0x4, fixed_abs, tag = 'smem constant byte address 0x4 - core index']
  #allocation1 [shape = 'u32[144,128]{1,0:T(1,128)}', space=vmem, size = 0x12000, scoped, tag = 'internal scratch']
  #allocation2 [shape = 'f32[8,2,128]{2,1,0:T(2,128)}', space=vmem, size = 0x2000, scoped, tag = 'scratch operand']
  #allocation3 [shape = 's32[1]{0}', space=sflag, size = 0x4, scoped, tag = 'scratch operand']
  #allocation4 [shape = 's32[1]{0}', space=sflag, size = 0x4, scoped, tag = 'scoped memory for tpu_custom_call.1']
  #allocation5 [shape = 'u8[512]{0}', space=smem, size = 0x200, scoped, tag = 'prefetched SMEM operand 0']
  #allocation10 [shape = 's32[]', space=sflag, size = 0x4, offset = 0, fixed_abs, tag = 'sflag constant byte address 0x0 - dummy sync flag']
  #allocation11 [shape = 's32[]', space=sflag, size = 0x4, offset = 0, fixed_abs, tag = 'sflag constant byte address 0x0 - dummy sync flag']
  #allocation12 [shape = 'u32[]', space=smem, size = 0x4, offset = 0x44, fixed_abs, tag = 'smem constant byte address 0x44 - assertion arg 0']
  #allocation13 [shape = 'u32[]', space=smem, size = 0x4, offset = 0x48, fixed_abs, tag = 'smem constant byte address 0x48 - assertion arg 1']
  #allocation14 [shape = 's32[]', space=sflag, size = 0x4, offset = 0, fixed_abs, tag = 'sflag constant byte address 0x0 - dummy sync flag']
  #allocation15 [shape = 's32[]', space=sflag, size = 0x4, offset = 0, fixed_abs, tag = 'sflag constant byte address 0x0 - dummy sync flag']
  %s0 = inlined_call_operand.hbm [shape: s32[16], index: 0, kind: input, shape index: {}]
  %s1 = inlined_call_operand.hbm [shape: f32[8,128], index: 1, kind: input, shape index: {}]
  %s2 = inlined_call_operand.hbm [shape: f32[64,128], index: 2, kind: input, shape index: {}]
  %s3 = inlined_call_operand.hbm [shape: f32[8,2,128], index: 3, kind: output, shape index: {}]
  %s4 = sld [smem:[#allocation0]]
  $region40: #{tpu_custom_call.1} parent=0
    _
  %s6 = ssub.s32 1, %s4
  %s7 = scalar_select 0, %s6, %s4
  %9 = dma.hbm_to_smem %s0, 16, [#allocation5], [#allocation4]
  %10 = dma.done [#allocation4], 16
  %11 = sfence
  $region1: #{tpu_custom_call.1} parent=0
    #allocation6 [shape = 'u8[4096]{0}', space=vmem, size = 0x1000, scoped, tag = 'input window, operand 1, single buffered']
    #allocation7 [shape = 's32[1]{0}', space=sflag, size = 0x4, scoped, tag = 'scoped memory for tpu_custom_call.1']
    #allocation8 [shape = 's32[1]{0}', space=sflag, size = 0x4, scoped, tag = 'scoped memory for tpu_custom_call.1']
    #allocation9 [shape = 'u8[8192]{0}', space=vmem, size = 0x2000, scoped, tag = 'output window, operand 0, single buffered']
    %12 = vsyncpa [#allocation7], 0
    %13 = vsyncpa [#allocation8], 0
    // Predicated region
    $region2: #{tpu_custom_call.1} parent=1 // pred_check
      _
    $region3: #{tpu_custom_call.1} parent=1 // pred_check_branch
      %15 = sbr.rel (0) target = $region5
    $region4: #{tpu_custom_call.1} parent=1 // pred_region
      %s17 = ssub.s32 128, 128
      %18 = vsyncadd [#allocation7], %s17
      %s20 = sshll.u32 [#allocation6], 4
      %s21 = int_to_ptr.vmem [resolvable:$true] %s20
      %23 = dma.hbm_to_vmem [thread:$0]  %s1, 128, %s21, [#allocation7]
    $region5: #{tpu_custom_call.1} parent=1 // pred_fallthru
      _
    // Predicated region
    $region6: #{tpu_custom_call.1} parent=1 // pred_check
      _
    $region7: #{tpu_custom_call.1} parent=1 // pred_check_branch
      %25 = sbr.rel (0) target = $region9
    $region8: #{tpu_custom_call.1} parent=1 // pred_region
      %26 = dma.done [#allocation7], 128
    $region9: #{tpu_custom_call.1} parent=1 // pred_fallthru
      _
    %s27 = smul.u32 0, 16
    loop: start=0, step=1, limit=8
    $region10: #{tpu_custom_call.1} parent=1 // loop_pre_header
      _
    $region11: #{tpu_custom_call.1} parent=1 // loop_header
      %s29 = sphi 0, %s33
      %p30 = scmp.ge.s32.totalorder %s29, 8
    $region12: #{tpu_custom_call.1} parent=1 // loop_header_branch
      %32 = sbr.rel (%p30) target = $region16
    $region13: #{tpu_custom_call.1} parent=1 // loop_body
      %s34 = smul.u32 %s29, 2
      %s35 = sadd.s32 %s27, %s34
      %s36 = sld [smem:[#allocation5 + %s35]]
      %p37 = scmp.gt.s32.totalorder %s36, 0
      %s38 = scalar_select %p37, %s36, 0
      %p39 = scmp.lt.s32.totalorder %s38, 63
      %s40 = scalar_select %p39, %s38, 63
      %s41 = smul.addr %s40, 16
      %s42 = scalar_lea.hbm %s2, %s41
      %s43 = scalar_lea.vmem [#allocation2], %s34
      // Predicated region
      $region17: #{tpu_custom_call.1} parent=13 // pred_check
        _
      $region18: #{tpu_custom_call.1} parent=13 // pred_check_branch
        %45 = sbr.rel target = $region20
      $region19: #{tpu_custom_call.1} parent=13 // pred_region
        %46 = sst [smem:[#allocation12]] [#allocation11]
        %47 = sst [smem:[#allocation13]] [#allocation10]
      $region20: #{tpu_custom_call.1} parent=13 // pred_fallthru
        _
      %49 = shalt.err (0)
      %s51 = sshll.u32 %s43, 4
      %s52 = int_to_ptr.vmem [resolvable:$true] %s51
      %54 = dma.hbm_to_vmem [thread:$0]  %s42, 16, %s52, [#allocation3]
      %s55 = sadd.s32 %s35, 1
      %s56 = sld [smem:[#allocation5 + %s55]]
      %p57 = scmp.gt.s32.totalorder %s56, 0
      %s58 = scalar_select %p57, %s56, 0
      %p59 = scmp.lt.s32.totalorder %s58, 63
      %s60 = scalar_select %p59, %s58, 63
      %s61 = smul.addr %s60, 16
      %s62 = scalar_lea.hbm %s2, %s61
      %s63 = sadd.s32 1, %s34
      %s64 = scalar_lea.vmem [#allocation2], %s63
      // Predicated region
      $region21: #{tpu_custom_call.1} parent=13 // pred_check
        _
      $region22: #{tpu_custom_call.1} parent=13 // pred_check_branch
        %66 = sbr.rel target = $region24
      $region23: #{tpu_custom_call.1} parent=13 // pred_region
        %67 = sst [smem:[#allocation12]] [#allocation15]
        %68 = sst [smem:[#allocation13]] [#allocation14]
      $region24: #{tpu_custom_call.1} parent=13 // pred_fallthru
        _
      %70 = shalt.err (0)
      %s72 = sshll.u32 %s64, 4
      %s73 = int_to_ptr.vmem [resolvable:$true] %s72
      %75 = dma.hbm_to_vmem [thread:$0]  %s62, 16, %s73, [#allocation3]
    $region14: #{tpu_custom_call.1} parent=1 // loop_footer
      %s33 = sadd.s32 1, %s29
    $region15: #{tpu_custom_call.1} parent=1 // loop_footer_branch
      %28 = sbr.rel target = $region11
    $region16: #{tpu_custom_call.1} parent=1 // loop_exit
      _
    loop: start=0, step=1, limit=8
    $region25: #{tpu_custom_call.1} parent=1 // loop_pre_header
      _
    $region26: #{tpu_custom_call.1} parent=1 // loop_header
      %s77 = sphi 0, %s81
      %p78 = scmp.ge.s32.totalorder %s77, 8
    $region27: #{tpu_custom_call.1} parent=1 // loop_header_branch
      %80 = sbr.rel (%p78) target = $region31
    $region28: #{tpu_custom_call.1} parent=1 // loop_body
      %83 = dma.done [#allocation3], 16
      %85 = dma.done [#allocation3], 16
    $region29: #{tpu_custom_call.1} parent=1 // loop_footer
      %s81 = sadd.s32 1, %s77
    $region30: #{tpu_custom_call.1} parent=1 // loop_footer_branch
      %76 = sbr.rel target = $region26
    $region31: #{tpu_custom_call.1} parent=1 // loop_exit
      _
    %v86 = vld [vmem:[#allocation6] sm:$0xff]
    %v87 = vld [vmem:[#allocation2] sm:$0x3]
    %v88 = vld [vmem:[#allocation2 + $0x2] sm:$0x3]
    %v89 = vld [vmem:[#allocation2 + $0x4] sm:$0x3]
    %v90 = vld [vmem:[#allocation2 + $0x6] sm:$0x3]
    %v91 = vld [vmem:[#allocation2 + $0x8] sm:$0x3]
    %v92 = vld [vmem:[#allocation2 + $0xa] sm:$0x3]
    %v93 = vld [vmem:[#allocation2 + $0xc] sm:$0x3]
    %v94 = vld [vmem:[#allocation2 + $0xe] sm:$0x3]
    %v95 = vmul.f32 %v87, 11.313708
    %v96 = vmul.f32 %v88, 11.313708
    %v97 = vmul.f32 %v89, 11.313708
    %v98 = vmul.f32 %v90, 11.313708
    %v99 = vmul.f32 %v91, 11.313708
    %v100 = vmul.f32 %v92, 11.313708
    %v101 = vmul.f32 %v93, 11.313708
    %v102 = vmul.f32 %v94, 11.313708
    %v104 = vcombine.high %v86, %v86
    %v106 = vunpack.c.l.s4 1966171168
    %v107 = vunpack.c.0.s8 %v106
    %v108 = vlaneseq
    %v109 = vshrl.u32 %v108, 7
    %v110 = vsub.s32 %v107, %v109
    %v111 = vrot.slane %v86, %v110
    %v113 = vunpack.c.l.s4 1966171168
    %v114 = vunpack.c.0.s8 %v113
    %v115 = vlaneseq
    %v116 = vshrl.u32 %v115, 7
    %v117 = vsub.s32 %v114, %v116
    %v118 = vrot.slane %v104, %v117
    %v119 = vcombine.high %v111, %v111
    %v120 = vcombine.high %v118, %v118
    %v122 = vunpack.c.l.s4 1966171168
    %v123 = vunpack.c.0.s8 %v122
    %v124 = vlaneseq
    %v125 = vshrl.u32 %v124, 7
    %v126 = vsub.s32 %v123, %v125
    %v127 = vrot.slane %v111, %v126
    %v129 = vunpack.c.l.s4 1966171168
    %v130 = vunpack.c.0.s8 %v129
    %v131 = vlaneseq
    %v132 = vshrl.u32 %v131, 7
    %v133 = vsub.s32 %v130, %v132
    %v134 = vrot.slane %v118, %v133
    %v136 = vunpack.c.l.s4 1966171168
    %v137 = vunpack.c.0.s8 %v136
    %v138 = vlaneseq
    %v139 = vshrl.u32 %v138, 7
    %v140 = vsub.s32 %v137, %v139
    %v141 = vrot.slane %v119, %v140
    %v143 = vunpack.c.l.s4 1966171168
    %v144 = vunpack.c.0.s8 %v143
    %v145 = vlaneseq
    %v146 = vshrl.u32 %v145, 7
    %v147 = vsub.s32 %v144, %v146
    %v148 = vrot.slane %v120, %v147
    %v149 = vcombine.high %v127, %v127
    %v150 = vcombine.high %v134, %v134
    %v151 = vcombine.high %v141, %v141
    %v152 = vcombine.high %v148, %v148
    %v153 = vlaneseq
    %v154 = vshrl.u32 %v153, 7
    %v155 = vsub.s32 0, %v154
    %v156 = vrot.slane %v127, %v155
    %v157 = vlaneseq
    %v158 = vshrl.u32 %v157, 7
    %v159 = vsub.s32 0, %v158
    %v160 = vrot.slane %v141, %v159
    %v161 = vlaneseq
    %v162 = vshrl.u32 %v161, 7
    %v163 = vsub.s32 0, %v162
    %v164 = vrot.slane %v149, %v163
    %v165 = vlaneseq
    %v166 = vshrl.u32 %v165, 7
    %v167 = vsub.s32 0, %v166
    %v168 = vrot.slane %v151, %v167
    %v169 = vlaneseq
    %v170 = vshrl.u32 %v169, 7
    %v171 = vsub.s32 0, %v170
    %v172 = vrot.slane %v134, %v171
    %v173 = vlaneseq
    %v174 = vshrl.u32 %v173, 7
    %v175 = vsub.s32 0, %v174
    %v176 = vrot.slane %v148, %v175
    %v177 = vlaneseq
    %v178 = vshrl.u32 %v177, 7
    %v179 = vsub.s32 0, %v178
    %v180 = vrot.slane %v150, %v179
    %v181 = vlaneseq
    %v182 = vshrl.u32 %v181, 7
    %v183 = vsub.s32 0, %v182
    %v184 = vrot.slane %v152, %v183
    %v193 = vadd.f32 %v95, %v156
    %v194 = vadd.f32 %v96, %v160
    %v195 = vadd.f32 %v97, %v164
    %v196 = vadd.f32 %v98, %v168
    %v197 = vadd.f32 %v99, %v172
    %v198 = vadd.f32 %v100, %v176
    %v199 = vadd.f32 %v101, %v180
    %v200 = vadd.f32 %v102, %v184
    %201 = vst [vmem:[#allocation9] sm:$0x3] %v193
    %202 = vst [vmem:[#allocation9 + $0x2] sm:$0x3] %v194
    %203 = vst [vmem:[#allocation9 + $0x4] sm:$0x3] %v195
    %204 = vst [vmem:[#allocation9 + $0x6] sm:$0x3] %v196
    %205 = vst [vmem:[#allocation9 + $0x8] sm:$0x3] %v197
    %206 = vst [vmem:[#allocation9 + $0xa] sm:$0x3] %v198
    %207 = vst [vmem:[#allocation9 + $0xc] sm:$0x3] %v199
    %208 = vst [vmem:[#allocation9 + $0xe] sm:$0x3] %v200
    // Predicated region
    $region32: #{tpu_custom_call.1} parent=1 // pred_check
      _
    $region33: #{tpu_custom_call.1} parent=1 // pred_check_branch
      %210 = sbr.rel (0) target = $region35
    $region34: #{tpu_custom_call.1} parent=1 // pred_region
      %s212 = ssub.s32 256, 256
      %213 = vsyncadd [#allocation8], %s212
      %s214 = sshll.u32 [#allocation9], 4
      %s215 = int_to_ptr.vmem [resolvable:$true] %s214
      %220 = dma.vmem_to_hbm [thread:$0]  %s215, 256, %s3, [#allocation8], 32, 32, 2
    $region35: #{tpu_custom_call.1} parent=1 // pred_fallthru
      _
    // Predicated region
    $region36: #{tpu_custom_call.1} parent=1 // pred_check
      _
    $region37: #{tpu_custom_call.1} parent=1 // pred_check_branch
      %222 = sbr.rel (0) target = $region39
    $region38: #{tpu_custom_call.1} parent=1 // pred_region
      %223 = dma.done [#allocation8], 256
    $region39: #{tpu_custom_call.1} parent=1 // pred_fallthru
      _
    %224 = vsyncpa [#allocation7], 1
    %225 = vsyncpa [#allocation8], 1
  %226 = vsyncmov [#allocation3]
  %s227 = vpop.sfrf %226
  %p228 = scmp.eq.s32.totalorder %s227, 0
  %p229 = pneg %p228
  %231 = shalt.err (%p229)

</llo_original>
